<compile_context>
chip_gen: v5e
topology: v5e:2x2
jax: 0.10.0
libtpu: 0.0.40
codegen_flags: <defaults>
</compile_context>

<pallas_src>
import jax
import jax.numpy as jnp
from jax.experimental import pallas as pl
from jax.experimental.pallas import tpu as pltpu

LANES = 128  # TPU vreg lane width


def logreg_kernel(x_ref, w_ref, b_ref, o_ref):
    # x_ref / o_ref: (TM, 128) lane-dense VMEM tiles.
    # w_ref, b_ref : (1, 1) SMEM scalars (nn.Linear(1,1) weight / bias).
    w = w_ref[0, 0]
    b = b_ref[0, 0]
    z = x_ref[...] * w + b                      # scalar FMA on the VPU
    # Exact sigmoid via tanh: single EUP op per vreg, no approx-reciprocal error.
    o_ref[...] = 0.5 * jnp.tanh(0.5 * z) + 0.5


def _round_up(v, m):
    return ((v + m - 1) // m) * m


def logistic_regression(x, w, b, *, tile_rows=2048, small_n_threshold=65536):
    """x: (N, 1) f32; w: (1, 1) f32 (nn.Linear weight); b: (1,) f32 (bias)."""
    n = x.shape[0]
    w2 = jnp.asarray(w, jnp.float32).reshape(1, 1)
    b2 = jnp.asarray(b, jnp.float32).reshape(1, 1)

    # Small-N fast path: fixed pad/custom-call/slice costs dominate here, a
    # fused XLA elementwise op is strictly faster.
    if n < small_n_threshold:
        return jax.nn.sigmoid(x.astype(jnp.float32) * w2[0, 0] + b2[0, 0])

    # Lane-dense repack: (N, 1) -> (rows8, 128) slab.  Pad only to a multiple
    # of 8 sublane rows (zero-copy when N is already a multiple of 1024); the
    # ragged last grid block is masked by Pallas, not by padding.
    xf = x.astype(jnp.float32).reshape(-1)
    rows = pl.cdiv(n, LANES)
    rows8 = _round_up(rows, 8)
    total = rows8 * LANES
    if total != n:
        xf = jnp.pad(xf, (0, total - n))
    x2d = xf.reshape(rows8, LANES)

    # Row tile: as large as possible (fewer grid steps), clamped to the slab,
    # and split in two when everything would fit in one tile so both v7x
    # TensorCores get a grid step.
    tm = min(tile_rows, rows8)
    if rows8 >= 16:
        tm = min(tm, _round_up(pl.cdiv(rows8, 2), 8))
    grid = (pl.cdiv(rows8, tm),)

    out2d = pl.pallas_call(
        logreg_kernel,
        out_shape=jax.ShapeDtypeStruct((rows8, LANES), jnp.float32),
        grid=grid,
        in_specs=[
            pl.BlockSpec((tm, LANES), lambda i: (i, 0)),         # x tiles (VMEM, pipelined)
            pl.BlockSpec(memory_space=pltpu.MemorySpace.SMEM),   # weight scalar
            pl.BlockSpec(memory_space=pltpu.MemorySpace.SMEM),   # bias scalar
        ],
        out_specs=pl.BlockSpec((tm, LANES), lambda i: (i, 0)),
        compiler_params=pltpu.CompilerParams(
            dimension_semantics=("parallel",),        # shard grid across TCs (v7x)
            allow_input_fusion=[True, False, False],  # fuse any residual pad into the input DMA
        ),
    )(x2d, w2, b2)

    # Drop padding, restore the module's (N, 1) output shape.
    return out2d.reshape(-1)[:n].reshape(n, 1)


if __name__ == "__main__":
    key = jax.random.PRNGKey(0)

    # Deterministic parameters, matching nn.Linear(1, 1) shapes.
    w = jnp.array([[0.75]], dtype=jnp.float32)   # weight: (out=1, in=1)
    b = jnp.array([-0.25], dtype=jnp.float32)    # bias:   (out=1,)

    # Cases:
    #  n=8    -> small-N fast path (no Pallas)
    #  n=300  -> Pallas path, padded slab (N not a multiple of 128), single tile
    #  n=2048 -> Pallas path, zero-copy slab, grid of 2 ("parallel" split)
    #  n=5000 -> Pallas path, multi-tile grid with a ragged last block
    cases = [
        (8, {}),
        (300, dict(small_n_threshold=0)),
        (2048, dict(small_n_threshold=0)),
        (5000, dict(small_n_threshold=0, tile_rows=16)),
    ]
    for n, kw in cases:
        x = jax.random.normal(jax.random.fold_in(key, n), (n, 1), dtype=jnp.float32)
        y = jax.block_until_ready(logistic_regression(x, w, b, **kw))

        # Reference check in plain JAX.
        y_ref = jax.nn.sigmoid(x @ w.T + b)
        assert y.shape == (n, 1)
        err = float(jnp.max(jnp.abs(y - y_ref)))
        assert jnp.allclose(y, y_ref, atol=1e-6), (n, err)

    print("KERNEL_OK")
</pallas_src>

<mosaic_0001>
module attributes {stable_mosaic.version = 11 : i64} {
  func.func @logreg_kernel(%arg0: i32, %arg1: memref<8x128xf32, #tpu.memory_space<vmem>>, %arg2: memref<1x1xf32, #tpu.memory_space<smem>>, %arg3: memref<1x1xf32, #tpu.memory_space<smem>>, %arg4: memref<8x128xf32, #tpu.memory_space<vmem>>) attributes {dimension_semantics = [#tpu.dimension_semantics<parallel>], iteration_bounds = array<i64: 1>, scalar_prefetch = 0 : i64, scratch_operands = 0 : i64, tpu.core_type = #tpu.core_type<tc>, window_params = [{transform_indices = @transform_0, window_bounds = array<i64: 8, 128>}, {transform_indices = @transform_1, window_bounds = array<i64: 1, 1>}, {transform_indices = @transform_2, window_bounds = array<i64: 1, 1>}, {transform_indices = @transform_3, window_bounds = array<i64: 8, 128>}]} {
    %c0 = arith.constant 0 : index
    %c0_0 = arith.constant 0 : index
    %0 = memref.load %arg2[%c0, %c0_0] : memref<1x1xf32, #tpu.memory_space<smem>>
    %c0_1 = arith.constant 0 : index
    %c0_2 = arith.constant 0 : index
    %1 = memref.load %arg3[%c0_1, %c0_2] : memref<1x1xf32, #tpu.memory_space<smem>>
    %c0_3 = arith.constant 0 : index
    %c0_4 = arith.constant 0 : index
    %2 = vector.load %arg1[%c0_3, %c0_4] : memref<8x128xf32, #tpu.memory_space<vmem>>, vector<8x128xf32>
    %3 = vector.broadcast %0 : f32 to vector<8x128xf32>
    %4 = arith.mulf %2, %3 : vector<8x128xf32>
    %5 = vector.broadcast %1 : f32 to vector<8x128xf32>
    %6 = arith.addf %4, %5 : vector<8x128xf32>
    %cst = arith.constant 5.000000e-01 : f32
    %7 = vector.broadcast %cst : f32 to vector<8x128xf32>
    %8 = arith.mulf %7, %6 : vector<8x128xf32>
    %9 = math.tanh %8 : vector<8x128xf32>
    %cst_5 = arith.constant 5.000000e-01 : f32
    %10 = vector.broadcast %cst_5 : f32 to vector<8x128xf32>
    %11 = arith.mulf %10, %9 : vector<8x128xf32>
    %cst_6 = arith.constant 5.000000e-01 : f32
    %12 = vector.broadcast %cst_6 : f32 to vector<8x128xf32>
    %13 = arith.addf %11, %12 : vector<8x128xf32>
    %c0_7 = arith.constant 0 : index
    %c0_8 = arith.constant 0 : index
    %14 = vector.load %arg4[%c0_7, %c0_8] : memref<8x128xf32, #tpu.memory_space<vmem>>, vector<8x128xf32>
    tpu.vector_store %arg4[%c0_7, %c0_8], %13 {strides = array<i32>} : memref<8x128xf32, #tpu.memory_space<vmem>>, vector<8x128xf32>,
    return
  }
  func.func @transform_0(%arg0: i32) -> (i32, i32) {
    %c0_i32 = arith.constant 0 : i32
    %c0_i32_0 = arith.constant 0 : i32
    return %arg0, %c0_i32 : i32, i32
  }
  func.func @transform_1(%arg0: i32) -> (i32, i32) {
    %c0_i32 = arith.constant 0 : i32
    %c0_i32_0 = arith.constant 0 : i32
    %c0_i32_1 = arith.constant 0 : i32
    return %c0_i32, %c0_i32_0 : i32, i32
  }
  func.func @transform_2(%arg0: i32) -> (i32, i32) {
    %c0_i32 = arith.constant 0 : i32
    %c0_i32_0 = arith.constant 0 : i32
    %c0_i32_1 = arith.constant 0 : i32
    return %c0_i32, %c0_i32_0 : i32, i32
  }
  func.func @transform_3(%arg0: i32) -> (i32, i32) {
    %c0_i32 = arith.constant 0 : i32
    %c0_i32_0 = arith.constant 0 : i32
    return %arg0, %c0_i32 : i32, i32
  }
}

</mosaic_0001>

<llo_original>
// kernel: tpu_custom_call.1
$region0: #{tpu_custom_call.1}
  #allocation0 [shape = 'u32[]', space=smem, size = 0x4, offset = 0x4, fixed_abs, tag = 'smem constant byte address 0x4 - core index']
  #allocation1 [shape = 'u32[72,128]{1,0:T(1,128)}', space=vmem, size = 0x9000, scoped, tag = 'internal scratch']
  #allocation2 [shape = 'f32[1,1]{1,0:T(1,128)S(6)}', space=smem, size = 0x200, scoped, tag = 'scoped memory for tpu_custom_call.1']
  #allocation3 [shape = 'f32[1,1]{1,0:T(1,128)S(6)}', space=smem, size = 0x200, scoped, tag = 'scoped memory for tpu_custom_call.1']
  %s0 = inlined_call_operand.hbm [shape: f32[8,128], index: 0, kind: input, shape index: {}]
  %s1 = inlined_call_operand.<no memory space> [shape: f32[1,1], index: 1, kind: input, shape index: {}]
  %s2 = inlined_call_operand.<no memory space> [shape: f32[1,1], index: 2, kind: input, shape index: {}]
  %s3 = inlined_call_operand.hbm [shape: f32[8,128], index: 3, kind: output, shape index: {}]
  %s4 = sld [smem:[#allocation0]]
  $region26: #{tpu_custom_call.1} parent=0
    _
  %s6 = ssub.s32 1, %s4
  %s7 = scalar_select 0, %s6, %s4
  %8 = sst [smem:[#allocation2]] %s1
  %9 = sst [smem:[#allocation3]] %s2
  $region1: #{tpu_custom_call.1} parent=0
    #allocation4 [shape = 'u8[4096]{0}', space=vmem, size = 0x1000, scoped, tag = 'input window, operand 0, single buffered']
    #allocation5 [shape = 's32[1]{0}', space=sflag, size = 0x4, scoped, tag = 'scoped memory for tpu_custom_call.1']
    #allocation6 [shape = 's32[1]{0}', space=sflag, size = 0x4, scoped, tag = 'scoped memory for tpu_custom_call.1']
    #allocation7 [shape = 'u8[4096]{0}', space=vmem, size = 0x1000, scoped, tag = 'output window, operand 0, single buffered']
    %10 = vsyncpa [#allocation5], 0
    %11 = vsyncpa [#allocation6], 0
    // Predicated region
    $region2: #{tpu_custom_call.1} parent=1 // pred_check
      _
    $region3: #{tpu_custom_call.1} parent=1 // pred_check_branch
      %13 = sbr.rel (0) target = $region5
    $region4: #{tpu_custom_call.1} parent=1 // pred_region
      %15 = vsyncadd [#allocation5], 0
      %s17 = sshll.u32 %s0, 4
      %s18 = int_to_ptr.hbm [resolvable:$true] %s17
      %s19 = sshll.u32 [#allocation4], 4
      %s20 = int_to_ptr.vmem [resolvable:$true] %s19
      %22 = dma.hbm_to_vmem [thread:$0]  %s18, 128, %s20, [#allocation5]
    $region5: #{tpu_custom_call.1} parent=1 // pred_fallthru
      _
    // Predicated region
    $region6: #{tpu_custom_call.1} parent=1 // pred_check
      _
    $region7: #{tpu_custom_call.1} parent=1 // pred_check_branch
      %24 = sbr.rel (0) target = $region9
    $region8: #{tpu_custom_call.1} parent=1 // pred_region
      _
    $region9: #{tpu_custom_call.1} parent=1 // pred_fallthru
      _
    // Predicated region
    $region10: #{tpu_custom_call.1} parent=1 // pred_check
      _
    $region11: #{tpu_custom_call.1} parent=1 // pred_check_branch
      %26 = sbr.rel (0) target = $region13
    $region12: #{tpu_custom_call.1} parent=1 // pred_region
      _
    $region13: #{tpu_custom_call.1} parent=1 // pred_fallthru
      _
    // Predicated region
    $region14: #{tpu_custom_call.1} parent=1 // pred_check
      _
    $region15: #{tpu_custom_call.1} parent=1 // pred_check_branch
      %28 = sbr.rel (0) target = $region17
    $region16: #{tpu_custom_call.1} parent=1 // pred_region
      %30 = dma.done [#allocation5], 128
    $region17: #{tpu_custom_call.1} parent=1 // pred_fallthru
      _
    %s31 = sld [smem:[#allocation2]]
    %s32 = sld [smem:[#allocation3]]
    %v33 = vld [vmem:[#allocation4] sm:$0xff]
    %v34 = vstv %s31
    %v35 = vmul.f32 %v33, %v34
    %v36 = vstv %s32
    %v37 = vadd.f32 %v35, %v36
    %v38 = vmul.f32 %v37, 0.5
    %v39 = vtanh.pop %v38
    %v40 = vmul.f32 %v39, 0.5
    %v41 = vadd.f32 %v40, 0.5
    %42 = vst [vmem:[#allocation7] sm:$0xff] %v41
    // Predicated region
    $region18: #{tpu_custom_call.1} parent=1 // pred_check
      _
    $region19: #{tpu_custom_call.1} parent=1 // pred_check_branch
      %44 = sbr.rel (0) target = $region21
    $region20: #{tpu_custom_call.1} parent=1 // pred_region
      %46 = vsyncadd [#allocation6], 0
      %s48 = sshll.u32 [#allocation7], 4
      %s49 = int_to_ptr.vmem [resolvable:$true] %s48
      %s50 = sshll.u32 %s3, 4
      %s51 = int_to_ptr.hbm [resolvable:$true] %s50
      %53 = dma.vmem_to_hbm [thread:$0]  %s49, 128, %s51, [#allocation6]
    $region21: #{tpu_custom_call.1} parent=1 // pred_fallthru
      _
    // Predicated region
    $region22: #{tpu_custom_call.1} parent=1 // pred_check
      _
    $region23: #{tpu_custom_call.1} parent=1 // pred_check_branch
      %55 = sbr.rel (0) target = $region25
    $region24: #{tpu_custom_call.1} parent=1 // pred_region
      %57 = dma.done [#allocation6], 128
    $region25: #{tpu_custom_call.1} parent=1 // pred_fallthru
      _
    %58 = vsyncpa [#allocation5], 1
    %59 = vsyncpa [#allocation6], 1

</llo_original>
